<compile_context>
chip_gen: v6e
topology: v6e:2x2x1
jax: 0.10.0
libtpu: 0.0.40
codegen_flags: <defaults>
</compile_context>

<pallas_src>
import functools

import jax
import jax.numpy as jnp
from jax import lax
from jax.experimental import pallas as pl
from jax.experimental.pallas import tpu as pltpu

FEATURE_DIM = 768            # Linear(768, output_size) in the module
NEGATIVE_SLOPE = 1.0         # nn.LeakyReLU(True) -> negative_slope == 1.0 (identity)


# ---------------------------------------------------------------------------
# Kernel body
# ---------------------------------------------------------------------------
def _fused_heads_kernel(x_ref, w_ref, b_ref, o_ref, *,
                        apply_activation, negative_slope):
    """One grid step == one (batch tile) x (fused-N tile) output block.

    x_ref: (tile_b, D)      compute-dtype features (batch zero-padded)
    w_ref: (tile_n, D)      compute-dtype stacked weights (PyTorch Linear layout)
    b_ref: (1, tile_n)      f32 stacked biases
    o_ref: (tile_b, tile_n) output tile (lane-dense)
    """
    x = x_ref[...]
    w = w_ref[...]
    # y = x @ W^T, contracting on dim 1 of both operands -> MXU matmul with
    # f32 accumulation, no explicit transpose in the kernel body.
    y = lax.dot_general(
        x, w,
        dimension_numbers=(((1,), (1,)), ((), ())),
        preferred_element_type=jnp.float32,
    )
    y = y + b_ref[...]                               # f32 epilogue (VPU slack)
    if apply_activation and negative_slope != 1.0:   # compile-time check
        y = jnp.where(y >= 0.0, y, negative_slope * y)
    o_ref[...] = y.astype(o_ref.dtype)


# ---------------------------------------------------------------------------
# Chip / tiling policy helpers
# ---------------------------------------------------------------------------
def _tpu_vmem_capacity_bytes():
    try:
        return int(pltpu.get_tpu_info().vmem_capacity_bytes)
    except Exception:
        return 128 * 1024 * 1024   # v5e/v6e default; conservative for v7x path below


def _tpu_is_multi_tensorcore():
    """v7x packs 2 TensorCores per chip sharing HBM; v5e/v6e have 1."""
    try:
        kind = jax.devices()[0].device_kind.lower()
    except Exception:
        return False
    return any(tag in kind for tag in ("v7", "7x"))


def _tile_working_set_bytes(tile_n, tile_b, d, weight_itemsize, out_itemsize):
    """Estimate of the double-buffered per-step VMEM footprint."""
    return (2 * tile_n * d * weight_itemsize       # weight tile, double-buffered
            + 2 * tile_b * tile_n * out_itemsize   # output tile, double-buffered
            + 2 * tile_b * d * weight_itemsize     # x tile (same block each step)
            + 2 * tile_n * 4                       # bias tile
            + (2 << 20))                           # scratch / layout slack


def _pick_tile_n(n, tile_b, d, *, weight_itemsize, out_itemsize,
                 multi_tc, vmem_budget):
    """Largest lane-aligned tile of the fused N axis that fits the VMEM budget.

    Single-TC (v5e/v6e): extra grid steps are pure serial overhead, so prefer
    the largest fitting tile (grid=(1,) for small N).
    v7x (2 TCs): prefer tiles giving an EVEN step count so the 'parallel'
    split balances the two cores' weight-DMA streams.
    """
    cands = sorted({c for c in range(128, n + 1, 128) if n % c == 0},
                   reverse=True)
    if not cands:
        # N not lane-aligned (small heads): single, possibly masked, tile.
        cands = [n]
    fitting = [c for c in cands
               if _tile_working_set_bytes(c, tile_b, d, weight_itemsize,
                                          out_itemsize) <= vmem_budget]
    if not fitting:
        fitting = [cands[-1]]
    if multi_tc:
        for c in fitting:
            if (n // c) % 2 == 0:
                return c
        for c in fitting:
            if n // c >= 2:
                return c
    return fitting[0]


# ---------------------------------------------------------------------------
# One-time parameter preparation (init-time, NOT per forward call)
# ---------------------------------------------------------------------------
def prepare_head_params(W, b, compute_dtype=jnp.bfloat16):
    """Convert stacked nn.Linear params once.

    W: (num_models, OUT, 768) PyTorch Linear layout -> (N, 768) compute_dtype
    b: (num_models, OUT)                            -> (1, N)   float32

    Hoisting the f32->bf16 weight cast out of the forward call removes an
    extra full read+write of the weights from every call's HBM traffic (the
    kernel is weight-bandwidth bound).  Pass compute_dtype=jnp.float32 as an
    escape hatch if bit-closeness to the f32 PyTorch forward matters.
    """
    m, out, d = W.shape
    assert d == FEATURE_DIM
    n = m * out
    w_flat = W.reshape(n, d).astype(compute_dtype)
    b_flat = b.reshape(1, n).astype(jnp.float32)
    return w_flat, b_flat


# ---------------------------------------------------------------------------
# Forward wrapper
# ---------------------------------------------------------------------------
def dino_heads_forward(x, w_flat, b_flat, num_models, *, num_classes=None,
                       negative_slope=NEGATIVE_SLOPE,
                       out_dtype=jnp.float32, tile_n=None):
    """Pallas implementation of DinoModelTorch.forward for feature inputs.

    x:       (B, 768) features (any float dtype; cast to w_flat.dtype, tiny)
    w_flat:  (N, 768)  stacked weights from prepare_head_params (N = M*OUT)
    b_flat:  (1, N)    stacked biases (f32) from prepare_head_params
    returns: (B, num_models, OUT) if num_classes is None,
             else (B, num_models, num_classes, OUT // num_classes)
    """
    B, D = x.shape
    N, D2 = w_flat.shape
    assert D == D2 == FEATURE_DIM
    assert N % num_models == 0
    compute_dtype = w_flat.dtype
    apply_activation = num_classes is None   # torch module only adds LeakyReLU
                                             # on the num_classes is None branch

    # ---- batch padding / tiling ------------------------------------------
    itemsize = jnp.dtype(compute_dtype).itemsize
    granule = 16 if itemsize < 4 else 8      # 16 rows fill a packed bf16 vreg
    Bp = -(-B // granule) * granule
    if Bp > 512:                             # large batch: tile it (2nd parallel axis)
        tile_b = 256
        Bp = -(-Bp // tile_b) * tile_b
    else:
        tile_b = Bp
    grid_b = Bp // tile_b

    x_c = x.astype(compute_dtype)
    if Bp != B:
        x_c = jnp.pad(x_c, ((0, Bp - B), (0, 0)))
    b_f = b_flat.astype(jnp.float32).reshape(1, N)

    # ---- fused-N tiling (chip-aware) --------------------------------------
    multi_tc = _tpu_is_multi_tensorcore()
    vmem_cap = _tpu_vmem_capacity_bytes()
    vmem_budget = min(96 << 20, int(vmem_cap * 0.4))
    out_itemsize = jnp.dtype(out_dtype).itemsize
    if tile_n is None:
        tile_n = _pick_tile_n(N, tile_b, D,
                              weight_itemsize=itemsize,
                              out_itemsize=out_itemsize,
                              multi_tc=multi_tc,
                              vmem_budget=vmem_budget)
    assert N % tile_n == 0
    grid_n = N // tile_n

    kernel = functools.partial(
        _fused_heads_kernel,
        apply_activation=apply_activation,
        negative_slope=float(negative_slope),   # static Python float, no tracer
    )

    # Weight BlockSpec; request a 3rd buffer only when tiles are small AND the
    # pipeline is long enough (>=3 steps) for it to hide extra DMA latency.
    w_index = lambda ni, bi: (ni, 0)
    w_spec = pl.BlockSpec((tile_n, D), w_index)
    if tile_n <= 256 and grid_n >= 3:
        try:
            w_spec = pl.BlockSpec((tile_n, D), w_index,
                                  pipeline_mode=pl.Buffered(3))
        except TypeError:
            pass   # older Pallas without pipeline_mode: default 2-deep buffering

    bytes_accessed = (x_c.size * x_c.dtype.itemsize
                      + w_flat.size * itemsize
                      + b_f.size * 4
                      + Bp * N * out_itemsize)
    cost = pl.CostEstimate(flops=2 * Bp * D * N,
                           transcendentals=0,
                           bytes_accessed=bytes_accessed)

    cp_kwargs = dict(dimension_semantics=("parallel", "parallel"))
    working_set = _tile_working_set_bytes(tile_n, tile_b, D, itemsize, out_itemsize)
    if working_set > (30 << 20):   # beyond the default scoped-VMEM limit
        cp_kwargs["vmem_limit_bytes"] = int(min(vmem_cap - (8 << 20),
                                                working_set + (8 << 20)))

    out_padded = pl.pallas_call(
        kernel,
        out_shape=jax.ShapeDtypeStruct((Bp, N), out_dtype),
        grid_spec=pltpu.PrefetchScalarGridSpec(
            num_scalar_prefetch=0,
            # Weight tile outer, batch tile inner: each (tile_n, 768) weight
            # block (the dominant HBM stream) is DMA'd once and reused across
            # all batch tiles.
            grid=(grid_n, grid_b),
            in_specs=[
                pl.BlockSpec((tile_b, D), lambda ni, bi: (bi, 0)),   # x tile
                w_spec,                                              # weight tile
                pl.BlockSpec((1, tile_n), lambda ni, bi: (0, ni)),   # bias tile
            ],
            out_specs=pl.BlockSpec((tile_b, tile_n), lambda ni, bi: (bi, ni)),
        ),
        compiler_params=pltpu.CompilerParams(**cp_kwargs),
        cost_estimate=cost,
    )(x_c, w_flat, b_f)

    out = out_padded[:B]                       # drop batch padding -> (B, N)
    out = out.reshape(B, num_models, -1)       # == torch.stack(outs, dim=1)
    if num_classes is not None:
        out = out.reshape(B, num_models, num_classes, -1)
    return out


# ---------------------------------------------------------------------------
# Pure-JAX reference (matches the PyTorch forward, feature path)
# ---------------------------------------------------------------------------
def _reference(x, W, b, *, num_classes=None, negative_slope=NEGATIVE_SLOPE):
    outs = []
    for i in range(W.shape[0]):
        y = x @ W[i].T + b[i]
        if num_classes is None and negative_slope != 1.0:
            y = jnp.where(y >= 0.0, y, negative_slope * y)
        outs.append(y)
    out = jnp.stack(outs, axis=1)
    if num_classes is not None:
        out = out.reshape(out.shape[0], W.shape[0], num_classes, -1)
    return out


if __name__ == "__main__":
    # Small shapes consistent with the module: Linear(768, output_size),
    # num_models heads, use_features=True so x is (batch, 768).
    B = 2
    NUM_MODELS = 2
    OUTPUT_SIZE = 128          # output_size of each head (lane-aligned)

    key = jax.random.PRNGKey(0)
    kx, kw, kb = jax.random.split(key, 3)

    x = jax.random.normal(kx, (B, FEATURE_DIM), dtype=jnp.float32)
    # deterministic synthetic Linear params (PyTorch layout: (out, in))
    W = 0.02 * jax.random.normal(kw, (NUM_MODELS, OUTPUT_SIZE, FEATURE_DIM),
                                 dtype=jnp.float32)
    bias = 0.1 * jax.random.normal(kb, (NUM_MODELS, OUTPUT_SIZE),
                                   dtype=jnp.float32)

    # One-time (init) weight prep: the per-call f32->bf16 cast is gone.
    w_flat, b_flat = prepare_head_params(W, bias)
    w_flat = jax.block_until_ready(w_flat)
    b_flat = jax.block_until_ready(b_flat)

    fwd = jax.jit(functools.partial(dino_heads_forward,
                                    num_models=NUM_MODELS,
                                    num_classes=None))
    out = fwd(x, w_flat, b_flat)
    out = jax.block_until_ready(out)

    ref = _reference(x, W, bias, num_classes=None)
    assert out.shape == (B, NUM_MODELS, OUTPUT_SIZE), out.shape
    # bf16 operands with f32 accumulation vs f32 reference: loose tolerance.
    assert jnp.allclose(out, ref, atol=2e-2, rtol=2e-2), "mismatch vs reference"

    print("KERNEL_OK")
</pallas_src>

<mosaic_0001>
module attributes {stable_mosaic.version = 11 : i64} {
  func.func @_fused_heads_kernel(%arg0: i32, %arg1: i32, %arg2: memref<16x768xbf16, #tpu.memory_space<vmem>>, %arg3: memref<256x768xbf16, #tpu.memory_space<vmem>>, %arg4: memref<1x256xf32, #tpu.memory_space<vmem>>, %arg5: memref<16x256xf32, #tpu.memory_space<vmem>>) attributes {dimension_semantics = [#tpu.dimension_semantics<parallel>, #tpu.dimension_semantics<parallel>], iteration_bounds = array<i64: 1, 1>, scalar_prefetch = 0 : i64, scratch_operands = 0 : i64, tpu.core_type = #tpu.core_type<tc>, window_params = [{transform_indices = @transform_0, window_bounds = array<i64: 16, 768>}, {transform_indices = @transform_1, window_bounds = array<i64: 256, 768>}, {transform_indices = @transform_2, window_bounds = array<i64: 1, 256>}, {transform_indices = @transform_3, window_bounds = array<i64: 16, 256>}]} {
    %c0 = arith.constant 0 : index
    %c0_0 = arith.constant 0 : index
    %0 = vector.load %arg2[%c0, %c0_0] : memref<16x768xbf16, #tpu.memory_space<vmem>>, vector<16x768xbf16>
    %c0_1 = arith.constant 0 : index
    %c0_2 = arith.constant 0 : index
    %1 = vector.load %arg3[%c0_1, %c0_2] : memref<256x768xbf16, #tpu.memory_space<vmem>>, vector<256x768xbf16>
    %cst = arith.constant dense<0.000000e+00> : vector<16x256xf32>
    %2 = tpu.matmul %0, %1, %cst {dimension_numbers = #tpu.dot_dimension_numbers<[1], [1], [0], [0], [0, 0, 1, 0], [], []>} : vector<16x768xbf16>, vector<256x768xbf16>, vector<16x256xf32> -> vector<16x256xf32>
    %c0_3 = arith.constant 0 : index
    %c0_4 = arith.constant 0 : index
    %3 = vector.load %arg4[%c0_3, %c0_4] : memref<1x256xf32, #tpu.memory_space<vmem>>, vector<1x256xf32>
    %4 = vector.broadcast %3 : vector<1x256xf32> to vector<16x256xf32>
    %5 = arith.addf %2, %4 : vector<16x256xf32>
    %c0_5 = arith.constant 0 : index
    %c0_6 = arith.constant 0 : index
    %6 = vector.load %arg5[%c0_5, %c0_6] : memref<16x256xf32, #tpu.memory_space<vmem>>, vector<16x256xf32>
    tpu.vector_store %arg5[%c0_5, %c0_6], %5 {strides = array<i32>} : memref<16x256xf32, #tpu.memory_space<vmem>>, vector<16x256xf32>,
    return
  }
  func.func @transform_0(%arg0: i32, %arg1: i32) -> (i32, i32) {
    %c0_i32 = arith.constant 0 : i32
    %c0_i32_0 = arith.constant 0 : i32
    return %arg1, %c0_i32 : i32, i32
  }
  func.func @transform_1(%arg0: i32, %arg1: i32) -> (i32, i32) {
    %c0_i32 = arith.constant 0 : i32
    %c0_i32_0 = arith.constant 0 : i32
    return %arg0, %c0_i32 : i32, i32
  }
  func.func @transform_2(%arg0: i32, %arg1: i32) -> (i32, i32) {
    %c0_i32 = arith.constant 0 : i32
    %c0_i32_0 = arith.constant 0 : i32
    return %c0_i32, %arg0 : i32, i32
  }
  func.func @transform_3(%arg0: i32, %arg1: i32) -> (i32, i32) {
    %c0_i32 = arith.constant 0 : i32
    return %arg1, %arg0 : i32, i32
  }
}

</mosaic_0001>

<llo_original>
// kernel: dino_heads_forward.1
$region0: #{dino_heads_forward.1}
  #allocation0 [shape = 'u32[]', space=smem, size = 0x4, offset = 0x4, fixed_abs, tag = 'smem constant byte address 0x4 - core index']
  #allocation1 [shape = 'u32[144,128]{1,0:T(1,128)}', space=vmem, size = 0x12000, scoped, tag = 'internal scratch']
  %s0 = inlined_call_operand.vmem [shape: bf16[16,768], index: 0, kind: input, shape index: {}]
  %s1 = inlined_call_operand.hbm [shape: bf16[256,768], index: 1, kind: input, shape index: {}]
  %s2 = inlined_call_operand.vmem [shape: f32[1,256], index: 2, kind: input, shape index: {}]
  %s3 = inlined_call_operand.vmem [shape: f32[16,256], index: 3, kind: output, shape index: {}]
  %s4 = sld [smem:[#allocation0]]
  $region26: #{dino_heads_forward.1} parent=0
    _
  %s6 = ssub.s32 1, %s4
  %s7 = scalar_select 0, %s6, %s4
  $region1: #{dino_heads_forward.1} parent=0
    #allocation2 [shape = 'u8[393216]{0}', space=vmem, size = 0x60000, scoped, tag = 'input window, operand 1, single buffered']
    #allocation3 [shape = 's32[1]{0}', space=sflag, size = 0x4, scoped, tag = 'scoped memory for dino_heads_forward.1']
    %8 = vsyncpa [#allocation3], 0
    // Predicated region
    $region2: #{dino_heads_forward.1} parent=1 // pred_check
      _
    $region3: #{dino_heads_forward.1} parent=1 // pred_check_branch
      %10 = sbr.rel (0) target = $region5
    $region4: #{dino_heads_forward.1} parent=1 // pred_region
      _
    $region5: #{dino_heads_forward.1} parent=1 // pred_fallthru
      _
    // Predicated region
    $region6: #{dino_heads_forward.1} parent=1 // pred_check
      _
    $region7: #{dino_heads_forward.1} parent=1 // pred_check_branch
      %12 = sbr.rel (0) target = $region9
    $region8: #{dino_heads_forward.1} parent=1 // pred_region
      %s14 = ssub.s32 12288, 12288
      %15 = vsyncadd [#allocation3], %s14
      %s16 = sshll.u32 [#allocation2], 4
      %s17 = int_to_ptr.vmem [resolvable:$true] %s16
      %22 = dma.hbm_to_vmem [thread:$0]  %s1, 12288, %s17, [#allocation3], 384, 384, 24
    $region9: #{dino_heads_forward.1} parent=1 // pred_fallthru
      _
    // Predicated region
    $region10: #{dino_heads_forward.1} parent=1 // pred_check
      _
    $region11: #{dino_heads_forward.1} parent=1 // pred_check_branch
      %24 = sbr.rel (0) target = $region13
    $region12: #{dino_heads_forward.1} parent=1 // pred_region
      _
    $region13: #{dino_heads_forward.1} parent=1 // pred_fallthru
      _
    // Predicated region
    $region14: #{dino_heads_forward.1} parent=1 // pred_check
      _
    $region15: #{dino_heads_forward.1} parent=1 // pred_check_branch
      %26 = sbr.rel (0) target = $region17
    $region16: #{dino_heads_forward.1} parent=1 // pred_region
      %27 = dma.done [#allocation3], 12288
    $region17: #{dino_heads_forward.1} parent=1 // pred_fallthru
      _
    %v28 = vld [vmem:[%s0] sm:$0xff]
    %v29 = vld [vmem:[%s0 + $0x8] sm:$0xff]
    %v30 = vld [vmem:[%s0 + $0x10] sm:$0xff]
    %v31 = vld [vmem:[%s0 + $0x18] sm:$0xff]
    %v32 = vld [vmem:[%s0 + $0x20] sm:$0xff]
    %v33 = vld [vmem:[%s0 + $0x28] sm:$0xff]
    %v34 = vld [vmem:[#allocation2] sm:$0xff]
    %v35 = vld [vmem:[#allocation2 + $0x8] sm:$0xff]
    %v36 = vld [vmem:[#allocation2 + $0x10] sm:$0xff]
    %v37 = vld [vmem:[#allocation2 + $0x18] sm:$0xff]
    %v38 = vld [vmem:[#allocation2 + $0x20] sm:$0xff]
    %v39 = vld [vmem:[#allocation2 + $0x28] sm:$0xff]
    %v40 = vld [vmem:[#allocation2 + $0x30] sm:$0xff]
    %v41 = vld [vmem:[#allocation2 + $0x38] sm:$0xff]
    %v42 = vld [vmem:[#allocation2 + $0x40] sm:$0xff]
    %v43 = vld [vmem:[#allocation2 + $0x48] sm:$0xff]
    %v44 = vld [vmem:[#allocation2 + $0x50] sm:$0xff]
    %v45 = vld [vmem:[#allocation2 + $0x58] sm:$0xff]
    %v46 = vld [vmem:[#allocation2 + $0x60] sm:$0xff]
    %v47 = vld [vmem:[#allocation2 + $0x68] sm:$0xff]
    %v48 = vld [vmem:[#allocation2 + $0x70] sm:$0xff]
    %v49 = vld [vmem:[#allocation2 + $0x78] sm:$0xff]
    %v50 = vld [vmem:[#allocation2 + $0x80] sm:$0xff]
    %v51 = vld [vmem:[#allocation2 + $0x88] sm:$0xff]
    %v52 = vld [vmem:[#allocation2 + $0x90] sm:$0xff]
    %v53 = vld [vmem:[#allocation2 + $0x98] sm:$0xff]
    %v54 = vld [vmem:[#allocation2 + $0xa0] sm:$0xff]
    %v55 = vld [vmem:[#allocation2 + $0xa8] sm:$0xff]
    %v56 = vld [vmem:[#allocation2 + $0xb0] sm:$0xff]
    %v57 = vld [vmem:[#allocation2 + $0xb8] sm:$0xff]
    %v58 = vld [vmem:[#allocation2 + $0xc0] sm:$0xff]
    %v59 = vld [vmem:[#allocation2 + $0xc8] sm:$0xff]
    %v60 = vld [vmem:[#allocation2 + $0xd0] sm:$0xff]
    %v61 = vld [vmem:[#allocation2 + $0xd8] sm:$0xff]
    %v62 = vld [vmem:[#allocation2 + $0xe0] sm:$0xff]
    %v63 = vld [vmem:[#allocation2 + $0xe8] sm:$0xff]
    %v64 = vld [vmem:[#allocation2 + $0xf0] sm:$0xff]
    %v65 = vld [vmem:[#allocation2 + $0xf8] sm:$0xff]
    %v66 = vld [vmem:[#allocation2 + $0x100] sm:$0xff]
    %v67 = vld [vmem:[#allocation2 + $0x108] sm:$0xff]
    %v68 = vld [vmem:[#allocation2 + $0x110] sm:$0xff]
    %v69 = vld [vmem:[#allocation2 + $0x118] sm:$0xff]
    %v70 = vld [vmem:[#allocation2 + $0x120] sm:$0xff]
    %v71 = vld [vmem:[#allocation2 + $0x128] sm:$0xff]
    %v72 = vld [vmem:[#allocation2 + $0x130] sm:$0xff]
    %v73 = vld [vmem:[#allocation2 + $0x138] sm:$0xff]
    %v74 = vld [vmem:[#allocation2 + $0x140] sm:$0xff]
    %v75 = vld [vmem:[#allocation2 + $0x148] sm:$0xff]
    %v76 = vld [vmem:[#allocation2 + $0x150] sm:$0xff]
    %v77 = vld [vmem:[#allocation2 + $0x158] sm:$0xff]
    %v78 = vld [vmem:[#allocation2 + $0x160] sm:$0xff]
    %v79 = vld [vmem:[#allocation2 + $0x168] sm:$0xff]
    %v80 = vld [vmem:[#allocation2 + $0x170] sm:$0xff]
    %v81 = vld [vmem:[#allocation2 + $0x178] sm:$0xff]
    %v82 = vld [vmem:[#allocation2 + $0x180] sm:$0xff]
    %v83 = vld [vmem:[#allocation2 + $0x188] sm:$0xff]
    %v84 = vld [vmem:[#allocation2 + $0x190] sm:$0xff]
    %v85 = vld [vmem:[#allocation2 + $0x198] sm:$0xff]
    %v86 = vld [vmem:[#allocation2 + $0x1a0] sm:$0xff]
    %v87 = vld [vmem:[#allocation2 + $0x1a8] sm:$0xff]
    %v88 = vld [vmem:[#allocation2 + $0x1b0] sm:$0xff]
    %v89 = vld [vmem:[#allocation2 + $0x1b8] sm:$0xff]
    %v90 = vld [vmem:[#allocation2 + $0x1c0] sm:$0xff]
    %v91 = vld [vmem:[#allocation2 + $0x1c8] sm:$0xff]
    %v92 = vld [vmem:[#allocation2 + $0x1d0] sm:$0xff]
    %v93 = vld [vmem:[#allocation2 + $0x1d8] sm:$0xff]
    %v94 = vld [vmem:[#allocation2 + $0x1e0] sm:$0xff]
    %v95 = vld [vmem:[#allocation2 + $0x1e8] sm:$0xff]
    %v96 = vld [vmem:[#allocation2 + $0x1f0] sm:$0xff]
    %v97 = vld [vmem:[#allocation2 + $0x1f8] sm:$0xff]
    %v98 = vld [vmem:[#allocation2 + $0x200] sm:$0xff]
    %v99 = vld [vmem:[#allocation2 + $0x208] sm:$0xff]
    %v100 = vld [vmem:[#allocation2 + $0x210] sm:$0xff]
    %v101 = vld [vmem:[#allocation2 + $0x218] sm:$0xff]
    %v102 = vld [vmem:[#allocation2 + $0x220] sm:$0xff]
    %v103 = vld [vmem:[#allocation2 + $0x228] sm:$0xff]
    %v104 = vld [vmem:[#allocation2 + $0x230] sm:$0xff]
    %v105 = vld [vmem:[#allocation2 + $0x238] sm:$0xff]
    %v106 = vld [vmem:[#allocation2 + $0x240] sm:$0xff]
    %v107 = vld [vmem:[#allocation2 + $0x248] sm:$0xff]
    %v108 = vld [vmem:[#allocation2 + $0x250] sm:$0xff]
    %v109 = vld [vmem:[#allocation2 + $0x258] sm:$0xff]
    %v110 = vld [vmem:[#allocation2 + $0x260] sm:$0xff]
    %v111 = vld [vmem:[#allocation2 + $0x268] sm:$0xff]
    %v112 = vld [vmem:[#allocation2 + $0x270] sm:$0xff]
    %v113 = vld [vmem:[#allocation2 + $0x278] sm:$0xff]
    %v114 = vld [vmem:[#allocation2 + $0x280] sm:$0xff]
    %v115 = vld [vmem:[#allocation2 + $0x288] sm:$0xff]
    %v116 = vld [vmem:[#allocation2 + $0x290] sm:$0xff]
    %v117 = vld [vmem:[#allocation2 + $0x298] sm:$0xff]
    %v118 = vld [vmem:[#allocation2 + $0x2a0] sm:$0xff]
    %v119 = vld [vmem:[#allocation2 + $0x2a8] sm:$0xff]
    %v120 = vld [vmem:[#allocation2 + $0x2b0] sm:$0xff]
    %v121 = vld [vmem:[#allocation2 + $0x2b8] sm:$0xff]
    %v122 = vld [vmem:[#allocation2 + $0x2c0] sm:$0xff]
    %v123 = vld [vmem:[#allocation2 + $0x2c8] sm:$0xff]
    %v124 = vld [vmem:[#allocation2 + $0x2d0] sm:$0xff]
    %v125 = vld [vmem:[#allocation2 + $0x2d8] sm:$0xff]
    %v126 = vld [vmem:[#allocation2 + $0x2e0] sm:$0xff]
    %v127 = vld [vmem:[#allocation2 + $0x2e8] sm:$0xff]
    %v128 = vld [vmem:[#allocation2 + $0x2f0] sm:$0xff]
    %v129 = vld [vmem:[#allocation2 + $0x2f8] sm:$0xff]
    %v130 = vld [vmem:[%s2] sm:$0x3]
    %v132 = vlaneseq
    %v133 = vshrl.u32 %v132, 7
    %v134 = vsub.s32 0, %v133
    %v135 = vrot.slane %v130, %v134
    %v136 = vlaneseq
    %v137 = vshrl.u32 %v136, 7
    %v138 = vsub.s32 1, %v137
    %v139 = vrot.slane %v130, %v138
    %v148 = vunpack.c.l.b16 %v28
    %v149 = vunpack.c.h.b16 %v28
    %v150 = vunpack.c.l.b16 %v29
    %v151 = vunpack.c.h.b16 %v29
    %v152 = vunpack.c.l.b16 %v30
    %v153 = vunpack.c.h.b16 %v30
    %v154 = vunpack.c.l.b16 %v31
    %v155 = vunpack.c.h.b16 %v31
    %v156 = vunpack.c.l.b16 %v32
    %v157 = vunpack.c.h.b16 %v32
    %v158 = vunpack.c.l.b16 %v33
    %v159 = vunpack.c.h.b16 %v33
    %v160 = vpack.c.b16 %v154, %v148
    %v161 = vpack.c.b16 %v155, %v149
    %v162 = vpack.c.b16 %v156, %v150
    %v163 = vpack.c.b16 %v157, %v151
    %v164 = vpack.c.b16 %v158, %v152
    %v165 = vpack.c.b16 %v159, %v153
    %v268 = vunpack.c.l.b16 %v34
    %v269 = vunpack.c.h.b16 %v34
    %v270 = vunpack.c.l.b16 %v35
    %v271 = vunpack.c.h.b16 %v35
    %v272 = vunpack.c.l.b16 %v36
    %v273 = vunpack.c.h.b16 %v36
    %v274 = vunpack.c.l.b16 %v37
    %v275 = vunpack.c.h.b16 %v37
    %v276 = vunpack.c.l.b16 %v38
    %v277 = vunpack.c.h.b16 %v38
    %v278 = vunpack.c.l.b16 %v39
    %v279 = vunpack.c.h.b16 %v39
    %v280 = vunpack.c.l.b16 %v40
    %v281 = vunpack.c.h.b16 %v40
    %v282 = vunpack.c.l.b16 %v41
    %v283 = vunpack.c.h.b16 %v41
    %v284 = vunpack.c.l.b16 %v42
    %v285 = vunpack.c.h.b16 %v42
    %v286 = vunpack.c.l.b16 %v43
    %v287 = vunpack.c.h.b16 %v43
    %v288 = vunpack.c.l.b16 %v44
    %v289 = vunpack.c.h.b16 %v44
    %v290 = vunpack.c.l.b16 %v45
    %v291 = vunpack.c.h.b16 %v45
    %v292 = vunpack.c.l.b16 %v46
    %v293 = vunpack.c.h.b16 %v46
    %v294 = vunpack.c.l.b16 %v47
    %v295 = vunpack.c.h.b16 %v47
    %v296 = vunpack.c.l.b16 %v48
    %v297 = vunpack.c.h.b16 %v48
    %v298 = vunpack.c.l.b16 %v49
    %v299 = vunpack.c.h.b16 %v49
    %v300 = vunpack.c.l.b16 %v50
    %v301 = vunpack.c.h.b16 %v50
    %v302 = vunpack.c.l.b16 %v51
    %v303 = vunpack.c.h.b16 %v51
    %v304 = vunpack.c.l.b16 %v52
    %v305 = vunpack.c.h.b16 %v52
    %v306 = vunpack.c.l.b16 %v53
    %v307 = vunpack.c.h.b16 %v53
    %v308 = vunpack.c.l.b16 %v54
    %v309 = vunpack.c.h.b16 %v54
    %v310 = vunpack.c.l.b16 %v55
    %v311 = vunpack.c.h.b16 %v55
    %v312 = vunpack.c.l.b16 %v56
    %v313 = vunpack.c.h.b16 %v56
    %v314 = vunpack.c.l.b16 %v57
    %v315 = vunpack.c.h.b16 %v57
    %v316 = vunpack.c.l.b16 %v58
    %v317 = vunpack.c.h.b16 %v58
    %v318 = vunpack.c.l.b16 %v59
    %v319 = vunpack.c.h.b16 %v59
    %v320 = vunpack.c.l.b16 %v60
    %v321 = vunpack.c.h.b16 %v60
    %v322 = vunpack.c.l.b16 %v61
    %v323 = vunpack.c.h.b16 %v61
    %v324 = vunpack.c.l.b16 %v62
    %v325 = vunpack.c.h.b16 %v62
    %v326 = vunpack.c.l.b16 %v63
    %v327 = vunpack.c.h.b16 %v63
    %v328 = vunpack.c.l.b16 %v64
    %v329 = vunpack.c.h.b16 %v64
    %v330 = vunpack.c.l.b16 %v65
    %v331 = vunpack.c.h.b16 %v65
    %v332 = vunpack.c.l.b16 %v66
    %v333 = vunpack.c.h.b16 %v66
    %v334 = vunpack.c.l.b16 %v67
    %v335 = vunpack.c.h.b16 %v67
    %v336 = vunpack.c.l.b16 %v68
    %v337 = vunpack.c.h.b16 %v68
    %v338 = vunpack.c.l.b16 %v69
    %v339 = vunpack.c.h.b16 %v69
    %v340 = vunpack.c.l.b16 %v70
    %v341 = vunpack.c.h.b16 %v70
    %v342 = vunpack.c.l.b16 %v71
    %v343 = vunpack.c.h.b16 %v71
    %v344 = vunpack.c.l.b16 %v72
    %v345 = vunpack.c.h.b16 %v72
    %v346 = vunpack.c.l.b16 %v73
    %v347 = vunpack.c.h.b16 %v73
    %v348 = vunpack.c.l.b16 %v74
    %v349 = vunpack.c.h.b16 %v74
    %v350 = vunpack.c.l.b16 %v75
    %v351 = vunpack.c.h.b16 %v75
    %v352 = vunpack.c.l.b16 %v76
    %v353 = vunpack.c.h.b16 %v76
    %v354 = vunpack.c.l.b16 %v77
    %v355 = vunpack.c.h.b16 %v77
    %v356 = vunpack.c.l.b16 %v78
    %v357 = vunpack.c.h.b16 %v78
    %v358 = vunpack.c.l.b16 %v79
    %v359 = vunpack.c.h.b16 %v79
    %v360 = vunpack.c.l.b16 %v80
    %v361 = vunpack.c.h.b16 %v80
    %v362 = vunpack.c.l.b16 %v81
    %v363 = vunpack.c.h.b16 %v81
    %v364 = vunpack.c.l.b16 %v82
    %v365 = vunpack.c.h.b16 %v82
    %v366 = vunpack.c.l.b16 %v83
    %v367 = vunpack.c.h.b16 %v83
    %v368 = vunpack.c.l.b16 %v84
    %v369 = vunpack.c.h.b16 %v84
    %v370 = vunpack.c.l.b16 %v85
    %v371 = vunpack.c.h.b16 %v85
    %v372 = vunpack.c.l.b16 %v86
    %v373 = vunpack.c.h.b16 %v86
    %v374 = vunpack.c.l.b16 %v87
    %v375 = vunpack.c.h.b16 %v87
    %v376 = vunpack.c.l.b16 %v88
    %v377 = vunpack.c.h.b16 %v88
    %v378 = vunpack.c.l.b16 %v89
    %v379 = vunpack.c.h.b16 %v89
    %v380 = vunpack.c.l.b16 %v90
    %v381 = vunpack.c.h.b16 %v90
    %v382 = vunpack.c.l.b16 %v91
    %v383 = vunpack.c.h.b16 %v91
    %v384 = vunpack.c.l.b16 %v92
    %v385 = vunpack.c.h.b16 %v92
    %v386 = vunpack.c.l.b16 %v93
    %v387 = vunpack.c.h.b16 %v93
    %v388 = vunpack.c.l.b16 %v94
    %v389 = vunpack.c.h.b16 %v94
    %v390 = vunpack.c.l.b16 %v95
    %v391 = vunpack.c.h.b16 %v95
    %v392 = vunpack.c.l.b16 %v96
    %v393 = vunpack.c.h.b16 %v96
    %v394 = vunpack.c.l.b16 %v97
    %v395 = vunpack.c.h.b16 %v97
    %v396 = vunpack.c.l.b16 %v98
    %v397 = vunpack.c.h.b16 %v98
    %v398 = vunpack.c.l.b16 %v99
    %v399 = vunpack.c.h.b16 %v99
    %v400 = vunpack.c.l.b16 %v100
    %v401 = vunpack.c.h.b16 %v100
    %v402 = vunpack.c.l.b16 %v101
    %v403 = vunpack.c.h.b16 %v101
    %v404 = vunpack.c.l.b16 %v102
    %v405 = vunpack.c.h.b16 %v102
    %v406 = vunpack.c.l.b16 %v103
    %v407 = vunpack.c.h.b16 %v103
    %v408 = vunpack.c.l.b16 %v104
    %v409 = vunpack.c.h.b16 %v104
    %v410 = vunpack.c.l.b16 %v105
    %v411 = vunpack.c.h.b16 %v105
    %v412 = vunpack.c.l.b16 %v106
    %v413 = vunpack.c.h.b16 %v106
    %v414 = vunpack.c.l.b16 %v107
    %v415 = vunpack.c.h.b16 %v107
    %v416 = vunpack.c.l.b16 %v108
    %v417 = vunpack.c.h.b16 %v108
    %v418 = vunpack.c.l.b16 %v109
    %v419 = vunpack.c.h.b16 %v109
    %v420 = vunpack.c.l.b16 %v110
    %v421 = vunpack.c.h.b16 %v110
    %v422 = vunpack.c.l.b16 %v111
    %v423 = vunpack.c.h.b16 %v111
    %v424 = vunpack.c.l.b16 %v112
    %v425 = vunpack.c.h.b16 %v112
    %v426 = vunpack.c.l.b16 %v113
    %v427 = vunpack.c.h.b16 %v113
    %v428 = vunpack.c.l.b16 %v114
    %v429 = vunpack.c.h.b16 %v114
    %v430 = vunpack.c.l.b16 %v115
    %v431 = vunpack.c.h.b16 %v115
    %v432 = vunpack.c.l.b16 %v116
    %v433 = vunpack.c.h.b16 %v116
    %v434 = vunpack.c.l.b16 %v117
    %v435 = vunpack.c.h.b16 %v117
    %v436 = vunpack.c.l.b16 %v118
    %v437 = vunpack.c.h.b16 %v118
    %v438 = vunpack.c.l.b16 %v119
    %v439 = vunpack.c.h.b16 %v119
    %v440 = vunpack.c.l.b16 %v120
    %v441 = vunpack.c.h.b16 %v120
    %v442 = vunpack.c.l.b16 %v121
    %v443 = vunpack.c.h.b16 %v121
    %v444 = vunpack.c.l.b16 %v122
    %v445 = vunpack.c.h.b16 %v122
    %v446 = vunpack.c.l.b16 %v123
    %v447 = vunpack.c.h.b16 %v123
    %v448 = vunpack.c.l.b16 %v124
    %v449 = vunpack.c.h.b16 %v124
    %v450 = vunpack.c.l.b16 %v125
    %v451 = vunpack.c.h.b16 %v125
    %v452 = vunpack.c.l.b16 %v126
    %v453 = vunpack.c.h.b16 %v126
    %v454 = vunpack.c.l.b16 %v127
    %v455 = vunpack.c.h.b16 %v127
    %v456 = vunpack.c.l.b16 %v128
    %v457 = vunpack.c.h.b16 %v128
    %v458 = vunpack.c.l.b16 %v129
    %v459 = vunpack.c.h.b16 %v129
    %v460 = vpack.c.b16 %v274, %v268
    %v461 = vpack.c.b16 %v275, %v269
    %v462 = vpack.c.b16 %v276, %v270
    %v463 = vpack.c.b16 %v277, %v271
    %v464 = vpack.c.b16 %v278, %v272
    %v465 = vpack.c.b16 %v279, %v273
    %v466 = vpack.c.b16 %v286, %v280
    %v467 = vpack.c.b16 %v287, %v281
    %v468 = vpack.c.b16 %v288, %v282
    %v469 = vpack.c.b16 %v289, %v283
    %v470 = vpack.c.b16 %v290, %v284
    %v471 = vpack.c.b16 %v291, %v285
    %v472 = vpack.c.b16 %v298, %v292
    %v473 = vpack.c.b16 %v299, %v293
    %v474 = vpack.c.b16 %v300, %v294
    %v475 = vpack.c.b16 %v301, %v295
    %v476 = vpack.c.b16 %v302, %v296
    %v477 = vpack.c.b16 %v303, %v297
    %v478 = vpack.c.b16 %v310, %v304
    %v479 = vpack.c.b16 %v311, %v305
    %v480 = vpack.c.b16 %v312, %v306
    %v481 = vpack.c.b16 %v313, %v307
    %v482 = vpack.c.b16 %v314, %v308
    %v483 = vpack.c.b16 %v315, %v309
    %v484 = vpack.c.b16 %v322, %v316
    %v485 = vpack.c.b16 %v323, %v317
    %v486 = vpack.c.b16 %v324, %v318
    %v487 = vpack.c.b16 %v325, %v319
    %v488 = vpack.c.b16 %v326, %v320
    %v489 = vpack.c.b16 %v327, %v321
    %v490 = vpack.c.b16 %v334, %v328
    %v491 = vpack.c.b16 %v335, %v329
    %v492 = vpack.c.b16 %v336, %v330
    %v493 = vpack.c.b16 %v337, %v331
    %v494 = vpack.c.b16 %v338, %v332
    %v495 = vpack.c.b16 %v339, %v333
    %v496 = vpack.c.b16 %v346, %v340
    %v497 = vpack.c.b16 %v347, %v341
    %v498 = vpack.c.b16 %v348, %v342
    %v499 = vpack.c.b16 %v349, %v343
    %v500 = vpack.c.b16 %v350, %v344
    %v501 = vpack.c.b16 %v351, %v345
    %v502 = vpack.c.b16 %v358, %v352
    %v503 = vpack.c.b16 %v359, %v353
    %v504 = vpack.c.b16 %v360, %v354
    %v505 = vpack.c.b16 %v361, %v355
    %v506 = vpack.c.b16 %v362, %v356
    %v507 = vpack.c.b16 %v363, %v357
    %v508 = vpack.c.b16 %v370, %v364
    %v509 = vpack.c.b16 %v371, %v365
    %v510 = vpack.c.b16 %v372, %v366
    %v511 = vpack.c.b16 %v373, %v367
    %v512 = vpack.c.b16 %v374, %v368
    %v513 = vpack.c.b16 %v375, %v369
    %v514 = vpack.c.b16 %v382, %v376
    %v515 = vpack.c.b16 %v383, %v377
    %v516 = vpack.c.b16 %v384, %v378
    %v517 = vpack.c.b16 %v385, %v379
    %v518 = vpack.c.b16 %v386, %v380
    %v519 = vpack.c.b16 %v387, %v381
    %v520 = vpack.c.b16 %v394, %v388
    %v521 = vpack.c.b16 %v395, %v389
    %v522 = vpack.c.b16 %v396, %v390
    %v523 = vpack.c.b16 %v397, %v391
    %v524 = vpack.c.b16 %v398, %v392
    %v525 = vpack.c.b16 %v399, %v393
    %v526 = vpack.c.b16 %v406, %v400
    %v527 = vpack.c.b16 %v407, %v401
    %v528 = vpack.c.b16 %v408, %v402
    %v529 = vpack.c.b16 %v409, %v403
    %v530 = vpack.c.b16 %v410, %v404
    %v531 = vpack.c.b16 %v411, %v405
    %v532 = vpack.c.b16 %v418, %v412
    %v533 = vpack.c.b16 %v419, %v413
    %v534 = vpack.c.b16 %v420, %v414
    %v535 = vpack.c.b16 %v421, %v415
    %v536 = vpack.c.b16 %v422, %v416
    %v537 = vpack.c.b16 %v423, %v417
    %v538 = vpack.c.b16 %v430, %v424
    %v539 = vpack.c.b16 %v431, %v425
    %v540 = vpack.c.b16 %v432, %v426
    %v541 = vpack.c.b16 %v433, %v427
    %v542 = vpack.c.b16 %v434, %v428
    %v543 = vpack.c.b16 %v435, %v429
    %v544 = vpack.c.b16 %v442, %v436
    %v545 = vpack.c.b16 %v443, %v437
    %v546 = vpack.c.b16 %v444, %v438
    %v547 = vpack.c.b16 %v445, %v439
    %v548 = vpack.c.b16 %v446, %v440
    %v549 = vpack.c.b16 %v447, %v441
    %v550 = vpack.c.b16 %v454, %v448
    %v551 = vpack.c.b16 %v455, %v449
    %v552 = vpack.c.b16 %v456, %v450
    %v553 = vpack.c.b16 %v457, %v451
    %v554 = vpack.c.b16 %v458, %v452
    %v555 = vpack.c.b16 %v459, %v453
    %652 = vmatprep.subr.bf16.mxu0 %v503
    %653 = vmatpush1.bf16.xpose.msra.mxu0 %v502
    %654 = vmatprep.subr.bf16.mxu0 %v497
    %655 = vmatpush1.bf16.xpose.msra.mxu0 %v496
    %656 = vmatprep.subr.bf16.mxu0 %v491
    %657 = vmatpush1.bf16.xpose.msra.mxu0 %v490
    %658 = vmatprep.subr.bf16.mxu0 %v485
    %659 = vmatpush1.bf16.xpose.msra.mxu0 %v484
    %660 = vmatprep.subr.bf16.mxu0 %v479
    %661 = vmatpush1.bf16.xpose.msra.mxu0 %v478
    %662 = vmatprep.subr.bf16.mxu0 %v473
    %663 = vmatpush1.bf16.xpose.msra.mxu0 %v472
    %664 = vmatprep.subr.bf16.mxu0 %v467
    %665 = vmatpush1.bf16.xpose.msra.mxu0 %v466
    %666 = vmatprep.subr.bf16.mxu0 %v461
    %667 = vmatpush1.bf16.xpose.msra.mxu0 %v460
    %668 = vmatprep.subr.bf16.mxu0 %v551
    %669 = vmatpush2.bf16.xpose.msra.mxu0 %v550
    %670 = vmatprep.subr.bf16.mxu0 %v545
    %671 = vmatpush2.bf16.xpose.msra.mxu0 %v544
    %672 = vmatprep.subr.bf16.mxu0 %v539
    %673 = vmatpush2.bf16.xpose.msra.mxu0 %v538
    %674 = vmatprep.subr.bf16.mxu0 %v533
    %675 = vmatpush2.bf16.xpose.msra.mxu0 %v532
    %676 = vmatprep.subr.bf16.mxu0 %v527
    %677 = vmatpush2.bf16.xpose.msra.mxu0 %v526
    %678 = vmatprep.subr.bf16.mxu0 %v521
    %679 = vmatpush2.bf16.xpose.msra.mxu0 %v520
    %680 = vmatprep.subr.bf16.mxu0 %v515
    %681 = vmatpush2.bf16.xpose.msra.mxu0 %v514
    %682 = vmatprep.subr.bf16.mxu0 %v509
    %683 = vmatpush2.bf16.xpose.msra.mxu0 %v508
    %684 = vmatprep.mubr.bf16.mxu0 %v161
    %685 = vmatmul.mubr.bf16.gmra.mxu0 %v160
    %v686 = vpop.f32.mrf.mxu0
    %v687 = vadd.f32 %v135, %v686
    %v688 = vpop.f32.mrf.mxu0
    %v689 = vadd.f32 %v139, %v688
    %v690 = vpop.f32.mrf.mxu0
    %v691 = vadd.f32 %v135, %v690
    %v692 = vpop.f32.mrf.mxu0
    %v693 = vadd.f32 %v139, %v692
    %694 = vdwg.mxu0
    %695 = vmatprep.subr.bf16.mxu0 %v505
    %696 = vmatpush1.bf16.xpose.msra.mxu0 %v504
    %697 = vmatprep.subr.bf16.mxu0 %v499
    %698 = vmatpush1.bf16.xpose.msra.mxu0 %v498
    %699 = vmatprep.subr.bf16.mxu0 %v493
    %700 = vmatpush1.bf16.xpose.msra.mxu0 %v492
    %701 = vmatprep.subr.bf16.mxu0 %v487
    %702 = vmatpush1.bf16.xpose.msra.mxu0 %v486
    %703 = vmatprep.subr.bf16.mxu0 %v481
    %704 = vmatpush1.bf16.xpose.msra.mxu0 %v480
    %705 = vmatprep.subr.bf16.mxu0 %v475
    %706 = vmatpush1.bf16.xpose.msra.mxu0 %v474
    %707 = vmatprep.subr.bf16.mxu0 %v469
    %708 = vmatpush1.bf16.xpose.msra.mxu0 %v468
    %709 = vmatprep.subr.bf16.mxu0 %v463
    %710 = vmatpush1.bf16.xpose.msra.mxu0 %v462
    %711 = vmatprep.subr.bf16.mxu0 %v553
    %712 = vmatpush2.bf16.xpose.msra.mxu0 %v552
    %713 = vmatprep.subr.bf16.mxu0 %v547
    %714 = vmatpush2.bf16.xpose.msra.mxu0 %v546
    %715 = vmatprep.subr.bf16.mxu0 %v541
    %716 = vmatpush2.bf16.xpose.msra.mxu0 %v540
    %717 = vmatprep.subr.bf16.mxu0 %v535
    %718 = vmatpush2.bf16.xpose.msra.mxu0 %v534
    %719 = vmatprep.subr.bf16.mxu0 %v529
    %720 = vmatpush2.bf16.xpose.msra.mxu0 %v528
    %721 = vmatprep.subr.bf16.mxu0 %v523
    %722 = vmatpush2.bf16.xpose.msra.mxu0 %v522
    %723 = vmatprep.subr.bf16.mxu0 %v517
    %724 = vmatpush2.bf16.xpose.msra.mxu0 %v516
    %725 = vmatprep.subr.bf16.mxu0 %v511
    %726 = vmatpush2.bf16.xpose.msra.mxu0 %v510
    %727 = vmatprep.mubr.bf16.mxu0 %v163
    %728 = vmatmul.mubr.bf16.gmra.mxu0 %v162
    %v729 = vpop.f32.mrf.mxu0
    %v730 = vadd.f32 %v687, %v729
    %v731 = vpop.f32.mrf.mxu0
    %v732 = vadd.f32 %v689, %v731
    %v733 = vpop.f32.mrf.mxu0
    %v734 = vadd.f32 %v691, %v733
    %v735 = vpop.f32.mrf.mxu0
    %v736 = vadd.f32 %v693, %v735
    %737 = vdwg.mxu0
    %738 = vmatprep.subr.bf16.mxu0 %v507
    %739 = vmatpush1.bf16.xpose.msra.mxu0 %v506
    %740 = vmatprep.subr.bf16.mxu0 %v501
    %741 = vmatpush1.bf16.xpose.msra.mxu0 %v500
    %742 = vmatprep.subr.bf16.mxu0 %v495
    %743 = vmatpush1.bf16.xpose.msra.mxu0 %v494
    %744 = vmatprep.subr.bf16.mxu0 %v489
    %745 = vmatpush1.bf16.xpose.msra.mxu0 %v488
    %746 = vmatprep.subr.bf16.mxu0 %v483
    %747 = vmatpush1.bf16.xpose.msra.mxu0 %v482
    %748 = vmatprep.subr.bf16.mxu0 %v477
    %749 = vmatpush1.bf16.xpose.msra.mxu0 %v476
    %750 = vmatprep.subr.bf16.mxu0 %v471
    %751 = vmatpush1.bf16.xpose.msra.mxu0 %v470
    %752 = vmatprep.subr.bf16.mxu0 %v465
    %753 = vmatpush1.bf16.xpose.msra.mxu0 %v464
    %754 = vmatprep.subr.bf16.mxu0 %v555
    %755 = vmatpush2.bf16.xpose.msra.mxu0 %v554
    %756 = vmatprep.subr.bf16.mxu0 %v549
    %757 = vmatpush2.bf16.xpose.msra.mxu0 %v548
    %758 = vmatprep.subr.bf16.mxu0 %v543
    %759 = vmatpush2.bf16.xpose.msra.mxu0 %v542
    %760 = vmatprep.subr.bf16.mxu0 %v537
    %761 = vmatpush2.bf16.xpose.msra.mxu0 %v536
    %762 = vmatprep.subr.bf16.mxu0 %v531
    %763 = vmatpush2.bf16.xpose.msra.mxu0 %v530
    %764 = vmatprep.subr.bf16.mxu0 %v525
    %765 = vmatpush2.bf16.xpose.msra.mxu0 %v524
    %766 = vmatprep.subr.bf16.mxu0 %v519
    %767 = vmatpush2.bf16.xpose.msra.mxu0 %v518
    %768 = vmatprep.subr.bf16.mxu0 %v513
    %769 = vmatpush2.bf16.xpose.msra.mxu0 %v512
    %770 = vmatprep.mubr.bf16.mxu0 %v165
    %771 = vmatmul.mubr.bf16.gmra.mxu0 %v164
    %v772 = vpop.f32.mrf.mxu0
    %v773 = vadd.f32 %v730, %v772
    %v774 = vpop.f32.mrf.mxu0
    %v775 = vadd.f32 %v732, %v774
    %v776 = vpop.f32.mrf.mxu0
    %v777 = vadd.f32 %v734, %v776
    %v778 = vpop.f32.mrf.mxu0
    %v779 = vadd.f32 %v736, %v778
    %780 = vdwg.mxu0
    %781 = vst [vmem:[%s3] sm:$0xff] %v773
    %782 = vst [vmem:[%s3 + $0x8] sm:$0xff] %v775
    %783 = vst [vmem:[%s3 + $0x10] sm:$0xff] %v777
    %784 = vst [vmem:[%s3 + $0x18] sm:$0xff] %v779
    // Predicated region
    $region18: #{dino_heads_forward.1} parent=1 // pred_check
      _
    $region19: #{dino_heads_forward.1} parent=1 // pred_check_branch
      %786 = sbr.rel (0) target = $region21
    $region20: #{dino_heads_forward.1} parent=1 // pred_region
      _
    $region21: #{dino_heads_forward.1} parent=1 // pred_fallthru
      _
    // Predicated region
    $region22: #{dino_heads_forward.1} parent=1 // pred_check
      _
    $region23: #{dino_heads_forward.1} parent=1 // pred_check_branch
      %788 = sbr.rel (0) target = $region25
    $region24: #{dino_heads_forward.1} parent=1 // pred_region
      _
    $region25: #{dino_heads_forward.1} parent=1 // pred_fallthru
      _
    %789 = vsyncpa [#allocation3], 1

</llo_original>
